<compile_context>
chip_gen: v6e
topology: v6e:2x2x1
jax: 0.10.0
libtpu: 0.0.40
codegen_flags: <defaults>
</compile_context>

<pallas_src>
import math

import jax
import jax.numpy as jnp
from jax.experimental import pallas as pl
from jax.experimental.pallas import tpu as pltpu

_SQRT1_2 = 0.7071067811865476
# Abramowitz & Stegun 7.1.26 erf coefficients (|err| < 1.5e-7).
_A1, _A2, _A3, _A4, _A5 = (0.254829592, -0.284496736, 1.421413741,
                           -1.453152027, 1.061405429)
_P = 0.3275911


def _round_up(n: int, m: int) -> int:
    return ((n + m - 1) // m) * m


def _gelu_exact(g):
    """Exact (erf-based) GELU without a VPU divide or a select.

    gelu(g) = max(g, 0) - 0.5*|g|*P(t)*exp(-g^2/2),  t = 1/(1 + p*|g|/sqrt(2))
    (the sign handling of the odd erf folds into the max); the reciprocal and
    exp both go to the EUP, keeping the VALU epilogue short.
    """
    ag = jnp.abs(g)
    a = ag * _SQRT1_2
    t = pl.reciprocal(1.0 + _P * a, approx=True)
    poly = ((((_A5 * t + _A4) * t + _A3) * t + _A2) * t + _A1) * t
    return jnp.maximum(g, 0.0) - 0.5 * ag * poly * jnp.exp(-a * a)


def _make_kernel(tn: int):
    def kernel(x_ref, w_ref, b_ref, o_ref):
        # Single fused MXU matmul producing [val | gate] for this (tm, tn) tile,
        # bf16 operands with f32 accumulation.
        y = jnp.dot(x_ref[...], w_ref[...], preferred_element_type=jnp.float32)
        y = y + b_ref[...]                       # f32 bias
        val = y[:, :tn]
        gate = y[:, tn:]
        o_ref[...] = (val * _gelu_exact(gate)).astype(o_ref.dtype)
    return kernel


def _vmem_footprint(tm, tn, k, in_bytes, out_bytes):
    x_buf = 2 * tm * k * in_bytes              # double-buffered x tile
    w_buf = 2 * k * (2 * tn) * in_bytes        # double-buffered packed weight slab
    o_buf = 2 * tm * tn * out_bytes            # double-buffered output tile
    b_buf = 2 * (2 * tn) * 4                   # f32 bias tile
    y_scratch = tm * (2 * tn) * 4              # fused f32 [val|gate] intermediate
    return x_buf + w_buf + o_buf + b_buf + y_scratch


def pack_geglu_params(weight, bias, *, tn: int = 256,
                      compute_dtype=jnp.bfloat16):
    """One-time weight/bias packing (call at model init, NOT per forward).

    weight: (2*dim_out, dim_in)  -- PyTorch nn.Linear layout
    bias:   (2*dim_out,)
    Returns (w_packed, b_packed, dim_out, tn_effective); w_packed has the value
    and gate halves interleaved per N-tile as [val_tile | gate_tile] so each
    grid step does a single fused matmul.
    """
    two_dout, dim_in = weight.shape
    dim_out = two_dout // 2

    tn = min(tn, _round_up(dim_out, 128))      # lane-dense, 2*tn multiple of 256
    n_pad = _round_up(dim_out, tn)
    grid_n = n_pad // tn

    wt = weight.T                               # (dim_in, 2*dim_out), once at init
    w_val, w_gate = wt[:, :dim_out], wt[:, dim_out:]
    b_val, b_gate = bias[:dim_out], bias[dim_out:]
    if n_pad != dim_out:
        pad = n_pad - dim_out
        w_val = jnp.pad(w_val, ((0, 0), (0, pad)))
        w_gate = jnp.pad(w_gate, ((0, 0), (0, pad)))
        b_val = jnp.pad(b_val, ((0, pad),))
        b_gate = jnp.pad(b_gate, ((0, pad),))

    w_packed = jnp.concatenate(
        [w_val.reshape(dim_in, grid_n, 1, tn),
         w_gate.reshape(dim_in, grid_n, 1, tn)],
        axis=2).reshape(dim_in, 2 * n_pad).astype(compute_dtype)
    # Bias stays f32: it is added after the f32 accumulate; bytes are negligible.
    b_packed = jnp.concatenate(
        [b_val.reshape(grid_n, 1, tn),
         b_gate.reshape(grid_n, 1, tn)],
        axis=1).reshape(1, 2 * n_pad).astype(jnp.float32)
    return w_packed, b_packed, dim_out, tn


def geglu_packed(x, w_packed, b_packed, dim_out, tn, *, tm: int = 512,
                 vmem_budget: int = 48 * 1024 * 1024):
    """GEGLU forward with pre-packed weights. x: (..., dim_in)."""
    orig_shape = x.shape
    dim_in = orig_shape[-1]
    assert w_packed.shape[0] == dim_in
    compute_dtype = w_packed.dtype
    out_dtype = x.dtype
    in_b = jnp.dtype(compute_dtype).itemsize
    out_b = jnp.dtype(out_dtype).itemsize

    m_total = math.prod(orig_shape[:-1])
    x2 = x.reshape(m_total, dim_in).astype(compute_dtype)

    n_pad = w_packed.shape[1] // 2
    grid_n = n_pad // tn

    # Token-axis tile; budget the double-buffered footprint against v7x's
    # 64 MiB VMEM (48 MiB budget leaves headroom).
    tm = min(tm, _round_up(m_total, 8))
    while _vmem_footprint(tm, tn, dim_in, in_b, out_b) > vmem_budget and tm > 8:
        tm = max(8, _round_up(tm // 2, 8))

    m_pad = _round_up(m_total, tm)
    grid_m = m_pad // tm
    if m_pad != m_total:
        x2 = jnp.pad(x2, ((0, m_pad - m_total), (0, 0)))

    # Operand residency: keep resident whichever operand would otherwise be
    # re-streamed at larger total HBM cost.
    bytes_x = m_pad * dim_in * in_b
    bytes_w = w_packed.size * in_b
    weight_resident = (grid_n - 1) * bytes_x <= (grid_m - 1) * bytes_w

    if weight_resident:
        # N leading (megacore-sharded on v7x -> each TC streams half the
        # weight); weight slab resident across the inner m loop.
        grid = (grid_n, grid_m)
        x_spec = pl.BlockSpec((tm, dim_in), lambda j, i: (i, 0))
        w_spec = pl.BlockSpec((dim_in, 2 * tn), lambda j, i: (0, j))
        b_spec = pl.BlockSpec((1, 2 * tn), lambda j, i: (0, j))
        o_spec = pl.BlockSpec((tm, tn), lambda j, i: (i, j))
    else:
        # x tile resident across the inner n loop; weight slab re-streamed.
        grid = (grid_m, grid_n)
        x_spec = pl.BlockSpec((tm, dim_in), lambda i, j: (i, 0))
        w_spec = pl.BlockSpec((dim_in, 2 * tn), lambda i, j: (0, j))
        b_spec = pl.BlockSpec((1, 2 * tn), lambda i, j: (0, j))
        o_spec = pl.BlockSpec((tm, tn), lambda i, j: (i, j))

    vmem_limit = max(32 * 1024 * 1024,
                     _vmem_footprint(tm, tn, dim_in, in_b, out_b)
                     + 8 * 1024 * 1024)

    out = pl.pallas_call(
        _make_kernel(tn),
        out_shape=jax.ShapeDtypeStruct((m_pad, n_pad), out_dtype),
        grid_spec=pltpu.PrefetchScalarGridSpec(
            num_scalar_prefetch=0,
            grid=grid,
            in_specs=[x_spec, w_spec, b_spec],
            out_specs=o_spec,
        ),
        compiler_params=pltpu.CompilerParams(
            dimension_semantics=("parallel", "parallel"),
            vmem_limit_bytes=int(vmem_limit),
        ),
    )(x2, w_packed, b_packed)

    out = out[:m_total, :dim_out]
    return out.reshape(orig_shape[:-1] + (dim_out,))


def geglu(x, weight, bias, *, tm: int = 512, tn: int = 256,
          compute_dtype=jnp.bfloat16):
    """Convenience one-shot path (packs weights on the fly)."""
    w_packed, b_packed, dim_out, tn = pack_geglu_params(
        weight, bias, tn=tn, compute_dtype=compute_dtype)
    return geglu_packed(x, w_packed, b_packed, dim_out, tn, tm=tm)


def _reference(x, weight, bias):
    """Pure-JAX reference mirroring the PyTorch forward (exact erf GELU)."""
    y = x @ weight.T + bias
    dim_out = weight.shape[0] // 2
    val, gate = y[..., :dim_out], y[..., dim_out:]
    gelu_g = 0.5 * gate * (1.0 + jax.lax.erf(gate * _SQRT1_2))
    return val * gelu_g


if __name__ == "__main__":
    key = jax.random.PRNGKey(0)

    def _check(batch_shape, din, dout, tm, tn, k):
        kx, kw, kb = jax.random.split(k, 3)
        x = jax.random.normal(kx, batch_shape + (din,), jnp.float32)
        bound = 1.0 / math.sqrt(din)
        weight = jax.random.uniform(kw, (2 * dout, din), jnp.float32, -bound, bound)
        bias = jax.random.uniform(kb, (2 * dout,), jnp.float32, -bound, bound)

        # Packing hoisted out of the hot path (once per weight).
        w_packed, b_packed, dim_out, tn_eff = pack_geglu_params(weight, bias, tn=tn)
        out = geglu_packed(x, w_packed, b_packed, dim_out, tn_eff, tm=tm)
        out = jax.block_until_ready(out)
        assert out.shape == batch_shape + (dout,)
        assert out.dtype == x.dtype

        # Reference with bf16-cast operands (the kernel runs the MXU in bf16
        # with f32 accumulation); remaining diff is summation order, the erf
        # polynomial (<1.5e-7) and the EUP approx reciprocal.
        xq = x.astype(jnp.bfloat16).astype(jnp.float32)
        wq = weight.astype(jnp.bfloat16).astype(jnp.float32)
        ref = _reference(xq, wq, bias)
        err = float(jnp.max(jnp.abs(out.astype(jnp.float32) - ref)))
        assert jnp.allclose(out.astype(jnp.float32), ref, atol=1e-2, rtol=1e-2), err

    k1, k2 = jax.random.split(key)
    # (1) Aligned shapes: batch=2, seq=128, dim_in=64, dim_out=256; tm=tn=128
    #     gives a 2x2 grid and exercises the weight-resident (N-leading) order.
    _check((2, 128), 64, 256, tm=128, tn=128, k=k1)
    # (2) Ragged shapes (seq=50, dim_in=80, dim_out=200) exercising M/N
    #     zero-padding plus the x-resident grid order.
    _check((1, 50), 80, 200, tm=128, tn=128, k=k2)

    print("KERNEL_OK")
</pallas_src>

<mosaic_0001>
module attributes {stable_mosaic.version = 11 : i64} {
  func.func @kernel(%arg0: i32, %arg1: i32, %arg2: memref<128x64xbf16, #tpu.memory_space<vmem>>, %arg3: memref<64x256xbf16, #tpu.memory_space<vmem>>, %arg4: memref<1x256xf32, #tpu.memory_space<vmem>>, %arg5: memref<128x128xf32, #tpu.memory_space<vmem>>) attributes {dimension_semantics = [#tpu.dimension_semantics<parallel>, #tpu.dimension_semantics<parallel>], iteration_bounds = array<i64: 2, 2>, scalar_prefetch = 0 : i64, scratch_operands = 0 : i64, tpu.core_type = #tpu.core_type<tc>, window_params = [{transform_indices = @transform_0, window_bounds = array<i64: 128, 64>}, {transform_indices = @transform_1, window_bounds = array<i64: 64, 256>}, {transform_indices = @transform_2, window_bounds = array<i64: 1, 256>}, {transform_indices = @transform_3, window_bounds = array<i64: 128, 128>}]} {
    %c0 = arith.constant 0 : index
    %c0_0 = arith.constant 0 : index
    %0 = vector.load %arg2[%c0, %c0_0] : memref<128x64xbf16, #tpu.memory_space<vmem>>, vector<128x64xbf16>
    %c0_1 = arith.constant 0 : index
    %c0_2 = arith.constant 0 : index
    %1 = vector.load %arg3[%c0_1, %c0_2] : memref<64x256xbf16, #tpu.memory_space<vmem>>, vector<64x256xbf16>
    %cst = arith.constant dense<0.000000e+00> : vector<128x256xf32>
    %2 = tpu.matmul %0, %1, %cst {dimension_numbers = #tpu.dot_dimension_numbers<[1], [0], [0], [1], [0, 0, 1, 1], [], []>} : vector<128x64xbf16>, vector<64x256xbf16>, vector<128x256xf32> -> vector<128x256xf32>
    %c0_3 = arith.constant 0 : index
    %c0_4 = arith.constant 0 : index
    %3 = vector.load %arg4[%c0_3, %c0_4] : memref<1x256xf32, #tpu.memory_space<vmem>>, vector<1x256xf32>
    %4 = vector.broadcast %3 : vector<1x256xf32> to vector<128x256xf32>
    %5 = arith.addf %2, %4 : vector<128x256xf32>
    %6 = vector.extract_strided_slice %5 {offsets = [0, 0], sizes = [128, 128], strides = [1, 1]} : vector<128x256xf32> to vector<128x128xf32>
    %7 = vector.extract_strided_slice %5 {offsets = [0, 128], sizes = [128, 128], strides = [1, 1]} : vector<128x256xf32> to vector<128x128xf32>
    %8 = math.absf %7 : vector<128x128xf32>
    %cst_5 = arith.constant 0.707106769 : f32
    %9 = vector.broadcast %cst_5 : f32 to vector<128x128xf32>
    %10 = arith.mulf %8, %9 : vector<128x128xf32>
    %cst_6 = arith.constant 0.327591091 : f32
    %11 = vector.broadcast %cst_6 : f32 to vector<128x128xf32>
    %12 = arith.mulf %11, %10 : vector<128x128xf32>
    %cst_7 = arith.constant 1.000000e+00 : f32
    %13 = vector.broadcast %cst_7 : f32 to vector<128x128xf32>
    %14 = arith.addf %13, %12 : vector<128x128xf32>
    %15 = tpu.reciprocal %14 {approx = true} : vector<128x128xf32> -> vector<128x128xf32>
    %cst_8 = arith.constant 1.06140542 : f32
    %16 = vector.broadcast %cst_8 : f32 to vector<128x128xf32>
    %17 = arith.mulf %16, %15 : vector<128x128xf32>
    %cst_9 = arith.constant -1.45315206 : f32
    %18 = vector.broadcast %cst_9 : f32 to vector<128x128xf32>
    %19 = arith.addf %17, %18 : vector<128x128xf32>
    %20 = arith.mulf %19, %15 : vector<128x128xf32>
    %cst_10 = arith.constant 1.42141378 : f32
    %21 = vector.broadcast %cst_10 : f32 to vector<128x128xf32>
    %22 = arith.addf %20, %21 : vector<128x128xf32>
    %23 = arith.mulf %22, %15 : vector<128x128xf32>
    %cst_11 = arith.constant -0.284496725 : f32
    %24 = vector.broadcast %cst_11 : f32 to vector<128x128xf32>
    %25 = arith.addf %23, %24 : vector<128x128xf32>
    %26 = arith.mulf %25, %15 : vector<128x128xf32>
    %cst_12 = arith.constant 0.254829586 : f32
    %27 = vector.broadcast %cst_12 : f32 to vector<128x128xf32>
    %28 = arith.addf %26, %27 : vector<128x128xf32>
    %29 = arith.mulf %28, %15 : vector<128x128xf32>
    %cst_13 = arith.constant 0.000000e+00 : f32
    %30 = vector.broadcast %cst_13 : f32 to vector<128x128xf32>
    %31 = arith.maximumf %7, %30 : vector<128x128xf32>
    %cst_14 = arith.constant 5.000000e-01 : f32
    %32 = vector.broadcast %cst_14 : f32 to vector<128x128xf32>
    %33 = arith.mulf %32, %8 : vector<128x128xf32>
    %34 = arith.mulf %33, %29 : vector<128x128xf32>
    %cst_15 = arith.constant 0.000000e+00 : f32
    %35 = vector.broadcast %cst_15 : f32 to vector<128x128xf32>
    %36 = arith.subf %35, %10 : vector<128x128xf32>
    %37 = arith.mulf %36, %10 : vector<128x128xf32>
    %38 = math.exp %37 : vector<128x128xf32>
    %39 = arith.mulf %34, %38 : vector<128x128xf32>
    %40 = arith.subf %31, %39 : vector<128x128xf32>
    %41 = arith.mulf %6, %40 : vector<128x128xf32>
    %c0_16 = arith.constant 0 : index
    %c0_17 = arith.constant 0 : index
    %42 = vector.load %arg5[%c0_16, %c0_17] : memref<128x128xf32, #tpu.memory_space<vmem>>, vector<128x128xf32>
    tpu.vector_store %arg5[%c0_16, %c0_17], %41 {strides = array<i32>} : memref<128x128xf32, #tpu.memory_space<vmem>>, vector<128x128xf32>,
    return
  }
  func.func @transform_0(%arg0: i32, %arg1: i32) -> (i32, i32) {
    %c0_i32 = arith.constant 0 : i32
    %c0_i32_0 = arith.constant 0 : i32
    return %arg1, %c0_i32 : i32, i32
  }
  func.func @transform_1(%arg0: i32, %arg1: i32) -> (i32, i32) {
    %c0_i32 = arith.constant 0 : i32
    %c0_i32_0 = arith.constant 0 : i32
    return %c0_i32, %arg0 : i32, i32
  }
  func.func @transform_2(%arg0: i32, %arg1: i32) -> (i32, i32) {
    %c0_i32 = arith.constant 0 : i32
    %c0_i32_0 = arith.constant 0 : i32
    return %c0_i32, %arg0 : i32, i32
  }
  func.func @transform_3(%arg0: i32, %arg1: i32) -> (i32, i32) {
    %c0_i32 = arith.constant 0 : i32
    return %arg1, %arg0 : i32, i32
  }
}

</mosaic_0001>

<llo_original>
// kernel: tpu_custom_call.1
$region0: #{tpu_custom_call.1}
  #allocation0 [shape = 'u32[]', space=smem, size = 0x4, offset = 0x4, fixed_abs, tag = 'smem constant byte address 0x4 - core index']
  #allocation1 [shape = 'u32[144,128]{1,0:T(1,128)}', space=vmem, size = 0x12000, scoped, tag = 'internal scratch']
  %s0 = inlined_call_operand.vmem [shape: bf16[256,64], index: 0, kind: input, shape index: {}]
  %s1 = inlined_call_operand.vmem [shape: bf16[64,512], index: 1, kind: input, shape index: {}]
  %s2 = inlined_call_operand.vmem [shape: f32[1,512], index: 2, kind: input, shape index: {}]
  %s3 = inlined_call_operand.hbm [shape: f32[256,256], index: 3, kind: output, shape index: {}]
  %s4 = sld [smem:[#allocation0]]
  $region83: #{tpu_custom_call.1} parent=0
    _
  %s6 = ssub.s32 1, %s4
  %s7 = scalar_select 0, %s6, %s4
  $region1: #{tpu_custom_call.1} parent=0
    #allocation2 [shape = 'u8[65536]{0}', space=vmem, size = 0x10000, scoped, tag = 'input window, operand 1']
    #allocation3 [shape = 'u8[131072]{0}', space=vmem, size = 0x20000, scoped, tag = 'output window, operand 0']
    #allocation4 [shape = 's32[2]{0}', space=sflag, size = 0x8, scoped, tag = 'scoped memory for tpu_custom_call.1']
    %8 = vsyncpa [#allocation4], 0
    %s9 = scalar_lea.sflag [#allocation4], 1
    %10 = vsyncpa %s9, 0
    loop: start=0, step=1, limit=6
    $region2: #{tpu_custom_call.1} parent=1 // loop_pre_header
      _
    $region3: #{tpu_custom_call.1} parent=1 // loop_header
      %s12 = sphi 0, %s16
      %p13 = scmp.ge.s32.totalorder %s12, 6
      %s19 = sphi 0, %s31
      %s20 = sphi 0, %s27
      %s21 = sphi 0, %s19
      %s22 = sphi 0, %s20
      %s23 = sphi 0, %s21
      %s24 = sphi 0, %s22
      %s34 = sphi 0, %s36
      %s37 = sphi 0, %s34
      %s38 = sphi 0, %s37
      %s54 = sphi 0, %s38
      %s60 = sphi 0, %s62
      %s63 = sphi 0, %s60
      %s64 = sphi 0, %s63
      %s80 = sphi 0, %s64
      %s86 = sphi 0, %s88
      %s89 = sphi 0, %s86
      %s90 = sphi 0, %s89
      %s106 = sphi 0, %s90
      %s114 = sphi 0, %s116
      %s117 = sphi 0, %s114
      %s118 = sphi 0, %s117
      %s134 = sphi 0, %s118
    $region4: #{tpu_custom_call.1} parent=1 // loop_header_branch
      %15 = sbr.rel (%p13) target = $region8
    $region5: #{tpu_custom_call.1} parent=1 // loop_body
      %s17 = ssub.s32 %s12, 1
      %s18 = ssub.s32 %s12, 2
      %s25 = sadd.s32 1, %s20
      %p26 = scmp.ge.s32.totalorder %s25, 2
      %s27 = scalar_select %p26, 0, %s25
      %s28 = sadd.s32 1, %s19
      %s29 = scalar_select %p26, %s28, %s19
      %p30 = scmp.ge.s32.totalorder %s29, 2
      %s31 = scalar_select %p30, 0, %s29
      %s32 = ssub.s32 %s20, %s27
      %p33 = scmp.eq.s32.totalorder %s32, 0
      %s35 = sadd.s32 %s34, 1
      %s36 = scalar_select %p33, %s34, %s35
      %p39 = pneg %p33
      %p40 = scmp.eq.s32.totalorder %s12, 3
      %p41 = por %p39, %p40
      %p42 = scmp.ne.s32.totalorder %s34, %s37
      %p43 = scmp.eq.s32.totalorder %s12, 0
      %p44 = por %p42, %p43
      %p45 = scmp.ne.s32.totalorder %s34, %s37
      %p46 = scmp.eq.s32.totalorder %s17, 3
      %p47 = por %p45, %p46
      %p48 = scmp.ne.s32.totalorder %s37, %s38
      %p49 = scmp.eq.s32.totalorder %s17, 0
      %p50 = por %p48, %p49
      %p51 = scmp.ne.s32.totalorder %s37, %s38
      %p52 = scmp.eq.s32.totalorder %s18, 3
      %p53 = por %p51, %p52
      %p55 = scmp.ne.s32.totalorder %s38, %s54
      %p56 = scmp.eq.s32.totalorder %s18, 0
      %p57 = por %p55, %p56
      %s58 = ssub.s32 %s19, %s31
      %p59 = scmp.eq.s32.totalorder %s58, 0
      %s61 = sadd.s32 %s60, 1
      %s62 = scalar_select %p59, %s60, %s61
      %p65 = pneg %p59
      %p66 = scmp.eq.s32.totalorder %s12, 3
      %p67 = por %p65, %p66
      %p68 = scmp.ne.s32.totalorder %s60, %s63
      %p69 = scmp.eq.s32.totalorder %s12, 0
      %p70 = por %p68, %p69
      %p71 = scmp.ne.s32.totalorder %s60, %s63
      %p72 = scmp.eq.s32.totalorder %s17, 3
      %p73 = por %p71, %p72
      %p74 = scmp.ne.s32.totalorder %s63, %s64
      %p75 = scmp.eq.s32.totalorder %s17, 0
      %p76 = por %p74, %p75
      %p77 = scmp.ne.s32.totalorder %s63, %s64
      %p78 = scmp.eq.s32.totalorder %s18, 3
      %p79 = por %p77, %p78
      %p81 = scmp.ne.s32.totalorder %s64, %s80
      %p82 = scmp.eq.s32.totalorder %s18, 0
      %p83 = por %p81, %p82
      %s84 = ssub.s32 %s19, %s31
      %p85 = scmp.eq.s32.totalorder %s84, 0
      %s87 = sadd.s32 %s86, 1
      %s88 = scalar_select %p85, %s86, %s87
      %p91 = pneg %p85
      %p92 = scmp.eq.s32.totalorder %s12, 3
      %p93 = por %p91, %p92
      %p94 = scmp.ne.s32.totalorder %s86, %s89
      %p95 = scmp.eq.s32.totalorder %s12, 0
      %p96 = por %p94, %p95
      %p97 = scmp.ne.s32.totalorder %s86, %s89
      %p98 = scmp.eq.s32.totalorder %s17, 3
      %p99 = por %p97, %p98
      %p100 = scmp.ne.s32.totalorder %s89, %s90
      %p101 = scmp.eq.s32.totalorder %s17, 0
      %p102 = por %p100, %p101
      %p103 = scmp.ne.s32.totalorder %s89, %s90
      %p104 = scmp.eq.s32.totalorder %s18, 3
      %p105 = por %p103, %p104
      %p107 = scmp.ne.s32.totalorder %s90, %s106
      %p108 = scmp.eq.s32.totalorder %s18, 0
      %p109 = por %p107, %p108
      %s110 = ssub.s32 %s20, %s27
      %s111 = ssub.s32 %s19, %s31
      %s112 = sor.u32 %s110, %s111
      %p113 = scmp.eq.s32.totalorder %s112, 0
      %s115 = sadd.s32 %s114, 1
      %s116 = scalar_select %p113, %s114, %s115
      %p119 = pneg %p113
      %p120 = scmp.eq.s32.totalorder %s12, 3
      %p121 = por %p119, %p120
      %p122 = scmp.ne.s32.totalorder %s114, %s117
      %p123 = scmp.eq.s32.totalorder %s12, 0
      %p124 = por %p122, %p123
      %p125 = scmp.ne.s32.totalorder %s114, %s117
      %p126 = scmp.eq.s32.totalorder %s17, 3
      %p127 = por %p125, %p126
      %p128 = scmp.ne.s32.totalorder %s117, %s118
      %p129 = scmp.eq.s32.totalorder %s17, 0
      %p130 = por %p128, %p129
      %p131 = scmp.ne.s32.totalorder %s117, %s118
      %p132 = scmp.eq.s32.totalorder %s18, 3
      %p133 = por %p131, %p132
      %p135 = scmp.ne.s32.totalorder %s118, %s134
      %p136 = scmp.eq.s32.totalorder %s18, 0
      %p137 = por %p135, %p136
      %p138 = scmp.le.s32.totalorder 1, %s12
      %p139 = scmp.lt.s32.totalorder %s12, 5
      %p140 = pnand %p138, %p139
      %p141 = pneg %p140
      // Predicated region
      $region9: #{tpu_custom_call.1} parent=5 // pred_check
        _
      $region10: #{tpu_custom_call.1} parent=5 // pred_check_branch
        %143 = sbr.rel (%p140) target = $region12
      $region11: #{tpu_custom_call.1} parent=5 // pred_region
        %s144 = ssub.s32 %s12, 1
      $region12: #{tpu_custom_call.1} parent=5 // pred_fallthru
        _
      %p145 = scmp.lt.s32.totalorder %s12, 4
      // Predicated region
      $region13: #{tpu_custom_call.1} parent=5 // pred_check
        %p146 = pneg %p145
      $region14: #{tpu_custom_call.1} parent=5 // pred_check_branch
        %148 = sbr.rel (%p146) target = $region16
      $region15: #{tpu_custom_call.1} parent=5 // pred_region
        // Predicated region
        $region17: #{tpu_custom_call.1} parent=15 // pred_check
          %p149 = pneg %p44
        $region18: #{tpu_custom_call.1} parent=15 // pred_check_branch
          %151 = sbr.rel (%p149) target = $region20
        $region19: #{tpu_custom_call.1} parent=15 // pred_region
          %s152 = smul.u32 16, %s20
          %p153 = scmp.lt.s32.totalorder %s152, 31
          %s154 = scalar_select %p153, %s152, 31
          %s155 = smul.addr %s154, 4
          %s156 = scalar_lea.vmem %s0, %s155
          %s157 = smul.u32 16, %s20
        $region20: #{tpu_custom_call.1} parent=15 // pred_fallthru
          _
        // Predicated region
        $region21: #{tpu_custom_call.1} parent=15 // pred_check
          %p158 = pneg %p70
        $region22: #{tpu_custom_call.1} parent=15 // pred_check_branch
          %160 = sbr.rel (%p158) target = $region24
        $region23: #{tpu_custom_call.1} parent=15 // pred_region
          %s161 = sand.u32 %s60, 1
          %s162 = sand.u32 %s60, 1
          %s163 = smul.addr %s162, 64
          %s164 = scalar_lea.vmem [#allocation2], %s163
          %s165 = smul.u32 2, %s19
          %s166 = smul.addr %s165, 4
          %s167 = scalar_lea.vmem %s1, %s166
          // Predicated region
          $region25: #{tpu_custom_call.1} parent=23 // pred_check
            _
          $region26: #{tpu_custom_call.1} parent=23 // pred_check_branch
            %169 = sbr.rel (0) target = $region28
          $region27: #{tpu_custom_call.1} parent=23 // pred_region
            // Predicated region
            $region29: #{tpu_custom_call.1} parent=27 // pred_check
              _
            $region30: #{tpu_custom_call.1} parent=27 // pred_check_branch
              %171 = sbr.rel (0) target = $region32
            $region31: #{tpu_custom_call.1} parent=27 // pred_region
              // Predicated region
              $region44: #{tpu_custom_call.1} parent=31 // pred_check
                _
              $region45: #{tpu_custom_call.1} parent=31 // pred_check_branch
                %201 = sbr.rel (0) target = $region47
              $region46: #{tpu_custom_call.1} parent=31 // pred_region
                loop: start=0, step=1, limit=1
                $region48: #{tpu_custom_call.1} parent=46 // loop_pre_header
                  _
                $region49: #{tpu_custom_call.1} parent=46 // loop_header
                  %s203 = sphi 0, %s207
                  %p204 = scmp.ge.s32.totalorder %s203, 1
                  %s208 = sphi %s167, %s167
                  %s209 = sphi %s164, %s164
                $region50: #{tpu_custom_call.1} parent=46 // loop_header_branch
                  %206 = sbr.rel (%p204) target = $region54
                $region51: #{tpu_custom_call.1} parent=46 // loop_body
                  %v210 = vld [vmem:[%s208] sm:$0xff]
                  %211 = vst [vmem:[%s209] sm:$0xff] %v210
                  %v212 = vld [vmem:[%s208 + $0x10] sm:$0xff]
                  %213 = vst [vmem:[%s209 + $0x8] sm:$0xff] %v212
                  %v214 = vld [vmem:[%s208 + $0x20] sm:$0xff]
                  %215 = vst [vmem:[%s209 + $0x10] sm:$0xff] %v214
                  %v216 = vld [vmem:[%s208 + $0x30] sm:$0xff]
                  %217 = vst [vmem:[%s209 + $0x18] sm:$0xff] %v216
                  %v218 = vld [vmem:[%s208 + $0x40] sm:$0xff]
                  %219 = vst [vmem:[%s209 + $0x20] sm:$0xff] %v218
                  %v220 = vld [vmem:[%s208 + $0x50] sm:$0xff]
                  %221 = vst [vmem:[%s209 + $0x28] sm:$0xff] %v220
                  %v222 = vld [vmem:[%s208 + $0x60] sm:$0xff]
                  %223 = vst [vmem:[%s209 + $0x30] sm:$0xff] %v222
                  %v224 = vld [vmem:[%s208 + $0x70] sm:$0xff]
                  %225 = vst [vmem:[%s209 + $0x38] sm:$0xff] %v224
                $region52: #{tpu_custom_call.1} parent=46 // loop_footer
                  %s207 = sadd.s32 1, %s203
                $region53: #{tpu_custom_call.1} parent=46 // loop_footer_branch
                  %202 = sbr.rel target = $region49
                $region54: #{tpu_custom_call.1} parent=46 // loop_exit
                  _
              $region47: #{tpu_custom_call.1} parent=31 // pred_fallthru
                _
              // Predicated region
              $region55: #{tpu_custom_call.1} parent=31 // pred_check
                _
              $region56: #{tpu_custom_call.1} parent=31 // pred_check_branch
                %227 = sbr.rel target = $region58
              $region57: #{tpu_custom_call.1} parent=31 // pred_region
                _
              $region58: #{tpu_custom_call.1} parent=31 // pred_fallthru
                _
            $region32: #{tpu_custom_call.1} parent=27 // pred_fallthru
              _
            // Predicated region
            $region33: #{tpu_custom_call.1} parent=27 // pred_check
              _
            $region34: #{tpu_custom_call.1} parent=27 // pred_check_branch
              %173 = sbr.rel target = $region36
            $region35: #{tpu_custom_call.1} parent=27 // pred_region
              %s175 = ssub.s32 256, 1
              loop: start=0, step=1, limit=1
              $region37: #{tpu_custom_call.1} parent=35 // loop_pre_header
                _
              $region38: #{tpu_custom_call.1} parent=35 // loop_header
                %s177 = sphi 0, %s181
                %p178 = scmp.ge.s32.totalorder %s177, 1
                %s182 = sphi %s167, %s167
                %s183 = sphi %s164, %s164
              $region39: #{tpu_custom_call.1} parent=35 // loop_header_branch
                %180 = sbr.rel (%p178) target = $region43
              $region40: #{tpu_custom_call.1} parent=35 // loop_body
                %v184 = vld [vmem:[%s182] sm:%s175]
                %185 = vst [vmem:[%s183] sm:%s175] %v184
                %v186 = vld [vmem:[%s182 + $0x10] sm:%s175]
                %187 = vst [vmem:[%s183 + $0x8] sm:%s175] %v186
                %v188 = vld [vmem:[%s182 + $0x20] sm:%s175]
                %189 = vst [vmem:[%s183 + $0x10] sm:%s175] %v188
                %v190 = vld [vmem:[%s182 + $0x30] sm:%s175]
                %191 = vst [vmem:[%s183 + $0x18] sm:%s175] %v190
                %v192 = vld [vmem:[%s182 + $0x40] sm:%s175]
                %193 = vst [vmem:[%s183 + $0x20] sm:%s175] %v192
                %v194 = vld [vmem:[%s182 + $0x50] sm:%s175]
                %195 = vst [vmem:[%s183 + $0x28] sm:%s175] %v194
                %v196 = vld [vmem:[%s182 + $0x60] sm:%s175]
                %197 = vst [vmem:[%s183 + $0x30] sm:%s175] %v196
                %v198 = vld [vmem:[%s182 + $0x70] sm:%s175]
                %199 = vst [vmem:[%s183 + $0x38] sm:%s175] %v198
              $region41: #{tpu_custom_call.1} parent=35 // loop_footer
                %s181 = sadd.s32 1, %s177
              $region42: #{tpu_custom_call.1} parent=35 // loop_footer_branch
                %176 = sbr.rel target = $region38
              $region43: #{tpu_custom_call.1} parent=35 // loop_exit
                _
            $region36: #{tpu_custom_call.1} parent=27 // pred_fallthru
              _
          $region28: #{tpu_custom_call.1} parent=23 // pred_fallthru
            _
          %228 = vnop
        $region24: #{tpu_custom_call.1} parent=15 // pred_fallthru
          _
        // Predicated region
        $region59: #{tpu_custom_call.1} parent=15 // pred_check
          %p229 = pneg %p96
        $region60: #{tpu_custom_call.1} parent=15 // pred_check_branch
          %231 = sbr.rel (%p229) target = $region62
        $region61: #{tpu_custom_call.1} parent=15 // pred_region
          %s232 = smul.u32 2, %s19
          %p233 = scmp.lt.s32.totalorder %s232, 3
          %s234 = scalar_select %p233, %s232, 3
          %s235 = scalar_lea.vmem %s2, %s234
          %s236 = smul.u32 2, %s19
        $region62: #{tpu_custom_call.1} parent=15 // pred_fallthru
          _
      $region16: #{tpu_custom_call.1} parent=5 // pred_fallthru
        _
      %p237 = scmp.le.s32.totalorder 1, %s12
      %p238 = scmp.lt.s32.totalorder %s12, 5
      %p239 = pnand %p237, %p238
      %p240 = pneg %p239
      // Predicated region
      $region63: #{tpu_custom_call.1} parent=5 // pred_check
        _
      $region64: #{tpu_custom_call.1} parent=5 // pred_check_branch
        %242 = sbr.rel (%p239) target = $region66
      $region65: #{tpu_custom_call.1} parent=5 // pred_region
        %s243 = ssub.s32 %s12, 1
        %s244 = sand.u32 %s63, 1
        %s245 = sand.u32 %s63, 1
        %s246 = smul.addr %s245, 64
        %s247 = scalar_lea.vmem [#allocation2], %s246
        // Predicated region
        $region67: #{tpu_custom_call.1} parent=65 // pred_check
          %p248 = pneg %p76
        $region68: #{tpu_custom_call.1} parent=65 // pred_check_branch
          %250 = sbr.rel (%p248) target = $region70
        $region69: #{tpu_custom_call.1} parent=65 // pred_region
          _
        $region70: #{tpu_custom_call.1} parent=65 // pred_fallthru
          _
        %s251 = smul.u32 16, %s22
        %p252 = scmp.lt.s32.totalorder %s251, 31
        %s253 = scalar_select %p252, %s251, 31
        %s254 = smul.addr %s253, 4
        %s255 = scalar_lea.vmem %s0, %s254
        %p256 = pneg %p50
        %p257 = pneg %p47
        %s258 = sand.u32 %s63, 1
        %s259 = sand.u32 %s63, 1
        %s260 = smul.addr %s259, 64
        %s261 = scalar_lea.vmem [#allocation2], %s260
        %p262 = pneg %p76
        %p263 = pneg %p73
        %s264 = smul.u32 2, %s21
        %p265 = scmp.lt.s32.totalorder %s264, 3
        %s266 = scalar_select %p265, %s264, 3
        %s267 = scalar_lea.vmem %s2, %s266
        %p268 = pneg %p102
        %p269 = pneg %p99
        %p270 = pneg %p130
        %p271 = pneg %p127
        %s272 = sand.u32 %s117, 1
        %s273 = scalar_lea.sflag [#allocation4], %s272
        %s274 = sand.u32 %s117, 1
        %s275 = smul.addr %s274, 128
        %s276 = scalar_lea.vmem [#allocation3], %s275
        %s277 = smul.u32 16, %s22
        %p278 = scmp.lt.s32.totalorder %s277, 31
        %s279 = scalar_select %p278, %s277, 31
        %s280 = smul.addr %s279, 4
        %s281 = scalar_lea.vmem %s0, %s280
        %s282 = smul.u32 16, %s22
        %s283 = smul.u32 2, %s21
        %s284 = smul.u32 2, %s21
        %p285 = scmp.lt.s32.totalorder %s284, 3
        %s286 = scalar_select %p285, %s284, 3
        %s287 = scalar_lea.vmem %s2, %s286
        %s288 = smul.u32 2, %s21
        %s289 = smul.u32 16, %s22
        %v291 = vld [vmem:[%s281] sm:$0xf]
        %v292 = vld [vmem:[%s281 + $0x4] sm:$0xf]
        %v293 = vld [vmem:[%s281 + $0x8] sm:$0xf]
        %v294 = vld [vmem:[%s281 + $0xc] sm:$0xf]
        %v295 = vld [vmem:[%s281 + $0x10] sm:$0xf]
        %v296 = vld [vmem:[%s281 + $0x14] sm:$0xf]
        %v297 = vld [vmem:[%s281 + $0x18] sm:$0xf]
        %v298 = vld [vmem:[%s281 + $0x1c] sm:$0xf]
        %v299 = vld [vmem:[%s281 + $0x20] sm:$0xf]
        %v300 = vld [vmem:[%s281 + $0x24] sm:$0xf]
        %v301 = vld [vmem:[%s281 + $0x28] sm:$0xf]
        %v302 = vld [vmem:[%s281 + $0x2c] sm:$0xf]
        %v303 = vld [vmem:[%s281 + $0x30] sm:$0xf]
        %v304 = vld [vmem:[%s281 + $0x34] sm:$0xf]
        %v305 = vld [vmem:[%s281 + $0x38] sm:$0xf]
        %v306 = vld [vmem:[%s281 + $0x3c] sm:$0xf]
        %v307 = vld [vmem:[%s247] sm:$0xff]
        %v308 = vld [vmem:[%s247 + $0x8] sm:$0xff]
        %v309 = vld [vmem:[%s247 + $0x10] sm:$0xff]
        %v310 = vld [vmem:[%s247 + $0x18] sm:$0xff]
        %v311 = vld [vmem:[%s247 + $0x20] sm:$0xff]
        %v312 = vld [vmem:[%s247 + $0x28] sm:$0xff]
        %v313 = vld [vmem:[%s247 + $0x30] sm:$0xff]
        %v314 = vld [vmem:[%s247 + $0x38] sm:$0xff]
        %v315 = vld [vmem:[%s287] sm:$0x3]
        %v317 = vlaneseq
        %v318 = vshrl.u32 %v317, 7
        %v319 = vsub.s32 0, %v318
        %v320 = vrot.slane %v315, %v319
        %v321 = vlaneseq
        %v322 = vshrl.u32 %v321, 7
        %v323 = vsub.s32 1, %v322
        %v324 = vrot.slane %v315, %v323
        %v343 = vunpack.c.l.b16 %v291
        %v344 = vunpack.c.l.b16 %v292
        %v345 = vunpack.c.l.b16 %v293
        %v346 = vunpack.c.l.b16 %v294
        %v347 = vunpack.c.l.b16 %v295
        %v348 = vunpack.c.l.b16 %v296
        %v349 = vunpack.c.l.b16 %v297
        %v350 = vunpack.c.l.b16 %v298
        %v351 = vunpack.c.l.b16 %v299
        %v352 = vunpack.c.l.b16 %v300
        %v353 = vunpack.c.l.b16 %v301
        %v354 = vunpack.c.l.b16 %v302
        %v355 = vunpack.c.l.b16 %v303
        %v356 = vunpack.c.l.b16 %v304
        %v357 = vunpack.c.l.b16 %v305
        %v358 = vunpack.c.l.b16 %v306
        %v359 = vpack.c.b16 %v344, %v343
        %v360 = vpack.c.b16 %v346, %v345
        %v361 = vpack.c.b16 %v348, %v347
        %v362 = vpack.c.b16 %v350, %v349
        %v363 = vpack.c.b16 %v352, %v351
        %v364 = vpack.c.b16 %v354, %v353
        %v365 = vpack.c.b16 %v356, %v355
        %v366 = vpack.c.b16 %v358, %v357
        %v375 = vunpack.c.l.b16 %v307
        %v376 = vunpack.c.h.b16 %v307
        %v377 = vunpack.c.l.b16 %v308
        %v378 = vunpack.c.h.b16 %v308
        %v379 = vunpack.c.l.b16 %v309
        %v380 = vunpack.c.h.b16 %v309
        %v381 = vunpack.c.l.b16 %v310
        %v382 = vunpack.c.h.b16 %v310
        %v383 = vunpack.c.l.b16 %v311
        %v384 = vunpack.c.h.b16 %v311
        %v385 = vunpack.c.l.b16 %v312
        %v386 = vunpack.c.h.b16 %v312
        %v387 = vunpack.c.l.b16 %v313
        %v388 = vunpack.c.h.b16 %v313
        %v389 = vunpack.c.l.b16 %v314
        %v390 = vunpack.c.h.b16 %v314
        %v391 = vpack.c.b16 %v377, %v375
        %v392 = vpack.c.b16 %v378, %v376
        %v393 = vpack.c.b16 %v381, %v379
        %v394 = vpack.c.b16 %v382, %v380
        %v395 = vpack.c.b16 %v385, %v383
        %v396 = vpack.c.b16 %v386, %v384
        %v397 = vpack.c.b16 %v389, %v387
        %v398 = vpack.c.b16 %v390, %v388
        %vm407 = vcmask 523264
        %v409 = vsel %vm407, %v359, 0
        %v412 = vsel %vm407, %v360, 0
        %v415 = vsel %vm407, %v361, 0
        %v418 = vsel %vm407, %v362, 0
        %v421 = vsel %vm407, %v363, 0
        %v424 = vsel %vm407, %v364, 0
        %v427 = vsel %vm407, %v365, 0
        %v430 = vsel %vm407, %v366, 0
        %432 = vmatprep.subr.bf16.mxu0 0
        %433 = vmatpush1.bf16.msra.mxu0 0
        %434 = vmatprep.subr.bf16.mxu0 0
        %435 = vmatpush1.bf16.msra.mxu0 0
        %436 = vmatprep.subr.bf16.mxu0 0
        %437 = vmatpush1.bf16.msra.mxu0 0
        %438 = vmatprep.subr.bf16.mxu0 0
        %439 = vmatpush1.bf16.msra.mxu0 0
        %440 = vmatprep.subr.bf16.mxu0 %v398
        %441 = vmatpush1.bf16.msra.mxu0 %v397
        %442 = vmatprep.subr.bf16.mxu0 %v396
        %443 = vmatpush1.bf16.msra.mxu0 %v395
        %444 = vmatprep.subr.bf16.mxu0 %v394
        %445 = vmatpush1.bf16.msra.mxu0 %v393
        %446 = vmatprep.subr.bf16.mxu0 %v392
        %447 = vmatpush1.bf16.msra.mxu0 %v391
        %448 = vmatprep.subr.bf16.mxu0 0
        %449 = vmatpush2.bf16.msra.mxu0 0
        %450 = vmatprep.subr.bf16.mxu0 0
        %451 = vmatpush2.bf16.msra.mxu0 0
        %452 = vmatprep.subr.bf16.mxu0 0
        %453 = vmatpush2.bf16.msra.mxu0 0
        %454 = vmatprep.subr.bf16.mxu0 0
        %455 = vmatpush2.bf16.msra.mxu0 0
        %456 = vmatprep.subr.bf16.mxu0 0
        %457 = vmatpush2.bf16.msra.mxu0 0
        %458 = vmatprep.subr.bf16.mxu0 0
        %459 = vmatpush2.bf16.msra.mxu0 0
        %460 = vmatprep.subr.bf16.mxu0 0
        %461 = vmatpush2.bf16.msra.mxu0 0
        %462 = vmatprep.subr.bf16.mxu0 0
        %463 = vmatpush2.bf16.msra.mxu0 0
        %464 = vmatprep.mubr.bf16.mxu0 0
        %465 = vmatmul.mubr.bf16.gmra.mxu0 %v409
        %v466 = vpop.f32.mrf.mxu0
        %v467 = vadd.f32 %v320, %v466
        %v468 = vpop.f32.mrf.mxu0
        %v469 = vadd.f32 %v324, %v468
        %v470 = vpop.f32.mrf.mxu0
        %v471 = vadd.f32 %v320, %v470
        %v472 = vpop.f32.mrf.mxu0
        %v473 = vadd.f32 %v324, %v472
        %474 = vmatprep.mubr.bf16.mxu0 0
        %475 = vmatmul.mubr.bf16.gmra.mxu0 %v412
        %v476 = vpop.f32.mrf.mxu0
        %v477 = vadd.f32 %v320, %v476
        %v478 = vpop.f32.mrf.mxu0
        %v479 = vadd.f32 %v324, %v478
        %v480 = vpop.f32.mrf.mxu0
        %v481 = vadd.f32 %v320, %v480
        %v482 = vpop.f32.mrf.mxu0
        %v483 = vadd.f32 %v324, %v482
        %484 = vmatprep.mubr.bf16.mxu0 0
        %485 = vmatmul.mubr.bf16.gmra.mxu0 %v415
        %v486 = vpop.f32.mrf.mxu0
        %v487 = vadd.f32 %v320, %v486
        %v488 = vpop.f32.mrf.mxu0
        %v489 = vadd.f32 %v324, %v488
        %v490 = vpop.f32.mrf.mxu0
        %v491 = vadd.f32 %v320, %v490
        %v492 = vpop.f32.mrf.mxu0
        %v493 = vadd.f32 %v324, %v492
        %494 = vmatprep.mubr.bf16.mxu0 0
        %495 = vmatmul.mubr.bf16.gmra.mxu0 %v418
        %v496 = vpop.f32.mrf.mxu0
        %v497 = vadd.f32 %v320, %v496
        %v498 = vpop.f32.mrf.mxu0
        %v499 = vadd.f32 %v324, %v498
        %v500 = vpop.f32.mrf.mxu0
        %v501 = vadd.f32 %v320, %v500
        %v502 = vpop.f32.mrf.mxu0
        %v503 = vadd.f32 %v324, %v502
        %504 = vmatprep.mubr.bf16.mxu0 0
        %505 = vmatmul.mubr.bf16.gmra.mxu0 %v421
        %v506 = vpop.f32.mrf.mxu0
        %v507 = vadd.f32 %v320, %v506
        %v508 = vpop.f32.mrf.mxu0
        %v509 = vadd.f32 %v324, %v508
        %v510 = vpop.f32.mrf.mxu0
        %v511 = vadd.f32 %v320, %v510
        %v512 = vpop.f32.mrf.mxu0
        %v513 = vadd.f32 %v324, %v512
        %514 = vmatprep.mubr.bf16.mxu0 0
        %515 = vmatmul.mubr.bf16.gmra.mxu0 %v424
        %v516 = vpop.f32.mrf.mxu0
        %v517 = vadd.f32 %v320, %v516
        %v518 = vpop.f32.mrf.mxu0
        %v519 = vadd.f32 %v324, %v518
        %v520 = vpop.f32.mrf.mxu0
        %v521 = vadd.f32 %v320, %v520
        %v522 = vpop.f32.mrf.mxu0
        %v523 = vadd.f32 %v324, %v522
        %524 = vmatprep.mubr.bf16.mxu0 0
        %525 = vmatmul.mubr.bf16.gmra.mxu0 %v427
        %v526 = vpop.f32.mrf.mxu0
        %v527 = vadd.f32 %v320, %v526
        %v528 = vpop.f32.mrf.mxu0
        %v529 = vadd.f32 %v324, %v528
        %v530 = vpop.f32.mrf.mxu0
        %v531 = vadd.f32 %v320, %v530
        %v532 = vpop.f32.mrf.mxu0
        %v533 = vadd.f32 %v324, %v532
        %534 = vmatprep.mubr.bf16.mxu0 0
        %535 = vmatmul.mubr.bf16.gmra.mxu0 %v430
        %v536 = vpop.f32.mrf.mxu0
        %v537 = vadd.f32 %v320, %v536
        %v538 = vpop.f32.mrf.mxu0
        %v539 = vadd.f32 %v324, %v538
        %v540 = vpop.f32.mrf.mxu0
        %v541 = vadd.f32 %v320, %v540
        %v542 = vpop.f32.mrf.mxu0
        %v543 = vadd.f32 %v324, %v542
        %544 = vdwg.mxu0
        %v545 = vand.u32 2147483647, %v469
        %v546 = vand.u32 2147483647, %v473
        %v547 = vand.u32 2147483647, %v479
        %v548 = vand.u32 2147483647, %v483
        %v549 = vand.u32 2147483647, %v489
        %v550 = vand.u32 2147483647, %v493
        %v551 = vand.u32 2147483647, %v499
        %v552 = vand.u32 2147483647, %v503
        %v553 = vand.u32 2147483647, %v509
        %v554 = vand.u32 2147483647, %v513
        %v555 = vand.u32 2147483647, %v519
        %v556 = vand.u32 2147483647, %v523
        %v557 = vand.u32 2147483647, %v529
        %v558 = vand.u32 2147483647, %v533
        %v559 = vand.u32 2147483647, %v539
        %v560 = vand.u32 2147483647, %v543
        %v561 = vmul.f32 %v545, 0.70710677
        %v562 = vmul.f32 %v546, 0.70710677
        %v563 = vmul.f32 %v547, 0.70710677
        %v564 = vmul.f32 %v548, 0.70710677
        %v565 = vmul.f32 %v549, 0.70710677
        %v566 = vmul.f32 %v550, 0.70710677
        %v567 = vmul.f32 %v551, 0.70710677
        %v568 = vmul.f32 %v552, 0.70710677
        %v569 = vmul.f32 %v553, 0.70710677
        %v570 = vmul.f32 %v554, 0.70710677
        %v571 = vmul.f32 %v555, 0.70710677
        %v572 = vmul.f32 %v556, 0.70710677
        %v573 = vmul.f32 %v557, 0.70710677
        %v574 = vmul.f32 %v558, 0.70710677
        %v575 = vmul.f32 %v559, 0.70710677
        %v576 = vmul.f32 %v560, 0.70710677
        %v577 = vmul.f32 %v561, 0.3275911
        %v578 = vmul.f32 %v562, 0.3275911
        %v579 = vmul.f32 %v563, 0.3275911
        %v580 = vmul.f32 %v564, 0.3275911
        %v581 = vmul.f32 %v565, 0.3275911
        %v582 = vmul.f32 %v566, 0.3275911
        %v583 = vmul.f32 %v567, 0.3275911
        %v584 = vmul.f32 %v568, 0.3275911
        %v585 = vmul.f32 %v569, 0.3275911
        %v586 = vmul.f32 %v570, 0.3275911
        %v587 = vmul.f32 %v571, 0.3275911
        %v588 = vmul.f32 %v572, 0.3275911
        %v589 = vmul.f32 %v573, 0.3275911
        %v590 = vmul.f32 %v574, 0.3275911
        %v591 = vmul.f32 %v575, 0.3275911
        %v592 = vmul.f32 %v576, 0.3275911
        %v593 = vadd.f32 %v577, 1.0
        %v594 = vadd.f32 %v578, 1.0
        %v595 = vadd.f32 %v579, 1.0
        %v596 = vadd.f32 %v580, 1.0
        %v597 = vadd.f32 %v581, 1.0
        %v598 = vadd.f32 %v582, 1.0
        %v599 = vadd.f32 %v583, 1.0
        %v600 = vadd.f32 %v584, 1.0
        %v601 = vadd.f32 %v585, 1.0
        %v602 = vadd.f32 %v586, 1.0
        %v603 = vadd.f32 %v587, 1.0
        %v604 = vadd.f32 %v588, 1.0
        %v605 = vadd.f32 %v589, 1.0
        %v606 = vadd.f32 %v590, 1.0
        %v607 = vadd.f32 %v591, 1.0
        %v608 = vadd.f32 %v592, 1.0
        %v609 = vrcp.pop %v593
        %v610 = vrcp.pop %v594
        %v611 = vrcp.pop %v595
        %v612 = vrcp.pop %v596
        %v613 = vrcp.pop %v597
        %v614 = vrcp.pop %v598
        %v615 = vrcp.pop %v599
        %v616 = vrcp.pop %v600
        %v617 = vrcp.pop %v601
        %v618 = vrcp.pop %v602
        %v619 = vrcp.pop %v603
        %v620 = vrcp.pop %v604
        %v621 = vrcp.pop %v605
        %v622 = vrcp.pop %v606
        %v623 = vrcp.pop %v607
        %v624 = vrcp.pop %v608
        %v625 = vmul.f32 %v609, 1.0614054
        %v626 = vmul.f32 %v610, 1.0614054
        %v627 = vmul.f32 %v611, 1.0614054
        %v628 = vmul.f32 %v612, 1.0614054
        %v629 = vmul.f32 %v613, 1.0614054
        %v630 = vmul.f32 %v614, 1.0614054
        %v631 = vmul.f32 %v615, 1.0614054
        %v632 = vmul.f32 %v616, 1.0614054
        %v633 = vmul.f32 %v617, 1.0614054
        %v634 = vmul.f32 %v618, 1.0614054
        %v635 = vmul.f32 %v619, 1.0614054
        %v636 = vmul.f32 %v620, 1.0614054
        %v637 = vmul.f32 %v621, 1.0614054
        %v638 = vmul.f32 %v622, 1.0614054
        %v639 = vmul.f32 %v623, 1.0614054
        %v640 = vmul.f32 %v624, 1.0614054
        %v641 = vadd.f32 %v625, -1.4531521
        %v642 = vadd.f32 %v626, -1.4531521
        %v643 = vadd.f32 %v627, -1.4531521
        %v644 = vadd.f32 %v628, -1.4531521
        %v645 = vadd.f32 %v629, -1.4531521
        %v646 = vadd.f32 %v630, -1.4531521
        %v647 = vadd.f32 %v631, -1.4531521
        %v648 = vadd.f32 %v632, -1.4531521
        %v649 = vadd.f32 %v633, -1.4531521
        %v650 = vadd.f32 %v634, -1.4531521
        %v651 = vadd.f32 %v635, -1.4531521
        %v652 = vadd.f32 %v636, -1.4531521
        %v653 = vadd.f32 %v637, -1.4531521
        %v654 = vadd.f32 %v638, -1.4531521
        %v655 = vadd.f32 %v639, -1.4531521
        %v656 = vadd.f32 %v640, -1.4531521
        %v657 = vmul.f32 %v641, %v609
        %v658 = vmul.f32 %v642, %v610
        %v659 = vmul.f32 %v643, %v611
        %v660 = vmul.f32 %v644, %v612
        %v661 = vmul.f32 %v645, %v613
        %v662 = vmul.f32 %v646, %v614
        %v663 = vmul.f32 %v647, %v615
        %v664 = vmul.f32 %v648, %v616
        %v665 = vmul.f32 %v649, %v617
        %v666 = vmul.f32 %v650, %v618
        %v667 = vmul.f32 %v651, %v619
        %v668 = vmul.f32 %v652, %v620
        %v669 = vmul.f32 %v653, %v621
        %v670 = vmul.f32 %v654, %v622
        %v671 = vmul.f32 %v655, %v623
        %v672 = vmul.f32 %v656, %v624
        %v673 = vadd.f32 %v657, 1.4214138
        %v674 = vadd.f32 %v658, 1.4214138
        %v675 = vadd.f32 %v659, 1.4214138
        %v676 = vadd.f32 %v660, 1.4214138
        %v677 = vadd.f32 %v661, 1.4214138
        %v678 = vadd.f32 %v662, 1.4214138
        %v679 = vadd.f32 %v663, 1.4214138
        %v680 = vadd.f32 %v664, 1.4214138
        %v681 = vadd.f32 %v665, 1.4214138
        %v682 = vadd.f32 %v666, 1.4214138
        %v683 = vadd.f32 %v667, 1.4214138
        %v684 = vadd.f32 %v668, 1.4214138
        %v685 = vadd.f32 %v669, 1.4214138
        %v686 = vadd.f32 %v670, 1.4214138
        %v687 = vadd.f32 %v671, 1.4214138
        %v688 = vadd.f32 %v672, 1.4214138
        %v689 = vmul.f32 %v673, %v609
        %v690 = vmul.f32 %v674, %v610
        %v691 = vmul.f32 %v675, %v611
        %v692 = vmul.f32 %v676, %v612
        %v693 = vmul.f32 %v677, %v613
        %v694 = vmul.f32 %v678, %v614
        %v695 = vmul.f32 %v679, %v615
        %v696 = vmul.f32 %v680, %v616
        %v697 = vmul.f32 %v681, %v617
        %v698 = vmul.f32 %v682, %v618
        %v699 = vmul.f32 %v683, %v619
        %v700 = vmul.f32 %v684, %v620
        %v701 = vmul.f32 %v685, %v621
        %v702 = vmul.f32 %v686, %v622
        %v703 = vmul.f32 %v687, %v623
        %v704 = vmul.f32 %v688, %v624
        %v705 = vadd.f32 %v689, -0.28449672
        %v706 = vadd.f32 %v690, -0.28449672
        %v707 = vadd.f32 %v691, -0.28449672
        %v708 = vadd.f32 %v692, -0.28449672
        %v709 = vadd.f32 %v693, -0.28449672
        %v710 = vadd.f32 %v694, -0.28449672
        %v711 = vadd.f32 %v695, -0.28449672
        %v712 = vadd.f32 %v696, -0.28449672
        %v713 = vadd.f32 %v697, -0.28449672
        %v714 = vadd.f32 %v698, -0.28449672
        %v715 = vadd.f32 %v699, -0.28449672
        %v716 = vadd.f32 %v700, -0.28449672
        %v717 = vadd.f32 %v701, -0.28449672
        %v718 = vadd.f32 %v702, -0.28449672
        %v719 = vadd.f32 %v703, -0.28449672
        %v720 = vadd.f32 %v704, -0.28449672
        %v721 = vmul.f32 %v705, %v609
        %v722 = vmul.f32 %v706, %v610
        %v723 = vmul.f32 %v707, %v611
        %v724 = vmul.f32 %v708, %v612
        %v725 = vmul.f32 %v709, %v613
        %v726 = vmul.f32 %v710, %v614
        %v727 = vmul.f32 %v711, %v615
        %v728 = vmul.f32 %v712, %v616
        %v729 = vmul.f32 %v713, %v617
        %v730 = vmul.f32 %v714, %v618
        %v731 = vmul.f32 %v715, %v619
        %v732 = vmul.f32 %v716, %v620
        %v733 = vmul.f32 %v717, %v621
        %v734 = vmul.f32 %v718, %v622
        %v735 = vmul.f32 %v719, %v623
        %v736 = vmul.f32 %v720, %v624
        %v737 = vadd.f32 %v721, 0.2548296
        %v738 = vadd.f32 %v722, 0.2548296
        %v739 = vadd.f32 %v723, 0.2548296
        %v740 = vadd.f32 %v724, 0.2548296
        %v741 = vadd.f32 %v725, 0.2548296
        %v742 = vadd.f32 %v726, 0.2548296
        %v743 = vadd.f32 %v727, 0.2548296
        %v744 = vadd.f32 %v728, 0.2548296
        %v745 = vadd.f32 %v729, 0.2548296
        %v746 = vadd.f32 %v730, 0.2548296
        %v747 = vadd.f32 %v731, 0.2548296
        %v748 = vadd.f32 %v732, 0.2548296
        %v749 = vadd.f32 %v733, 0.2548296
        %v750 = vadd.f32 %v734, 0.2548296
        %v751 = vadd.f32 %v735, 0.2548296
        %v752 = vadd.f32 %v736, 0.2548296
        %v753 = vmul.f32 %v737, %v609
        %v754 = vmul.f32 %v738, %v610
        %v755 = vmul.f32 %v739, %v611
        %v756 = vmul.f32 %v740, %v612
        %v757 = vmul.f32 %v741, %v613
        %v758 = vmul.f32 %v742, %v614
        %v759 = vmul.f32 %v743, %v615
        %v760 = vmul.f32 %v744, %v616
        %v761 = vmul.f32 %v745, %v617
        %v762 = vmul.f32 %v746, %v618
        %v763 = vmul.f32 %v747, %v619
        %v764 = vmul.f32 %v748, %v620
        %v765 = vmul.f32 %v749, %v621
        %v766 = vmul.f32 %v750, %v622
        %v767 = vmul.f32 %v751, %v623
        %v768 = vmul.f32 %v752, %v624
        %v769 = vmax.f32 %v469, 0.0
        %v770 = vmax.f32 %v473, 0.0
        %v771 = vmax.f32 %v479, 0.0
        %v772 = vmax.f32 %v483, 0.0
        %v773 = vmax.f32 %v489, 0.0
        %v774 = vmax.f32 %v493, 0.0
        %v775 = vmax.f32 %v499, 0.0
        %v776 = vmax.f32 %v503, 0.0
        %v777 = vmax.f32 %v509, 0.0
        %v778 = vmax.f32 %v513, 0.0
        %v779 = vmax.f32 %v519, 0.0
        %v780 = vmax.f32 %v523, 0.0
        %v781 = vmax.f32 %v529, 0.0
        %v782 = vmax.f32 %v533, 0.0
        %v783 = vmax.f32 %v539, 0.0
        %v784 = vmax.f32 %v543, 0.0
        %v785 = vmul.f32 %v545, 0.5
        %v786 = vmul.f32 %v546, 0.5
        %v787 = vmul.f32 %v547, 0.5
        %v788 = vmul.f32 %v548, 0.5
        %v789 = vmul.f32 %v549, 0.5
        %v790 = vmul.f32 %v550, 0.5
        %v791 = vmul.f32 %v551, 0.5
        %v792 = vmul.f32 %v552, 0.5
        %v793 = vmul.f32 %v553, 0.5
        %v794 = vmul.f32 %v554, 0.5
        %v795 = vmul.f32 %v555, 0.5
        %v796 = vmul.f32 %v556, 0.5
        %v797 = vmul.f32 %v557, 0.5
        %v798 = vmul.f32 %v558, 0.5
        %v799 = vmul.f32 %v559, 0.5
        %v800 = vmul.f32 %v560, 0.5
        %v801 = vmul.f32 %v785, %v753
        %v802 = vmul.f32 %v786, %v754
        %v803 = vmul.f32 %v787, %v755
        %v804 = vmul.f32 %v788, %v756
        %v805 = vmul.f32 %v789, %v757
        %v806 = vmul.f32 %v790, %v758
        %v807 = vmul.f32 %v791, %v759
        %v808 = vmul.f32 %v792, %v760
        %v809 = vmul.f32 %v793, %v761
        %v810 = vmul.f32 %v794, %v762
        %v811 = vmul.f32 %v795, %v763
        %v812 = vmul.f32 %v796, %v764
        %v813 = vmul.f32 %v797, %v765
        %v814 = vmul.f32 %v798, %v766
        %v815 = vmul.f32 %v799, %v767
        %v816 = vmul.f32 %v800, %v768
        %v817 = vsub.f32 0.0, %v561
        %v818 = vsub.f32 0.0, %v562
        %v819 = vsub.f32 0.0, %v563
        %v820 = vsub.f32 0.0, %v564
        %v821 = vsub.f32 0.0, %v565
        %v822 = vsub.f32 0.0, %v566
        %v823 = vsub.f32 0.0, %v567
        %v824 = vsub.f32 0.0, %v568
        %v825 = vsub.f32 0.0, %v569
        %v826 = vsub.f32 0.0, %v570
        %v827 = vsub.f32 0.0, %v571
        %v828 = vsub.f32 0.0, %v572
        %v829 = vsub.f32 0.0, %v573
        %v830 = vsub.f32 0.0, %v574
        %v831 = vsub.f32 0.0, %v575
        %v832 = vsub.f32 0.0, %v576
        %v833 = vmul.f32 %v817, %v561
        %v834 = vmul.f32 %v818, %v562
        %v835 = vmul.f32 %v819, %v563
        %v836 = vmul.f32 %v820, %v564
        %v837 = vmul.f32 %v821, %v565
        %v838 = vmul.f32 %v822, %v566
        %v839 = vmul.f32 %v823, %v567
        %v840 = vmul.f32 %v824, %v568
        %v841 = vmul.f32 %v825, %v569
        %v842 = vmul.f32 %v826, %v570
        %v843 = vmul.f32 %v827, %v571
        %v844 = vmul.f32 %v828, %v572
        %v845 = vmul.f32 %v829, %v573
        %v846 = vmul.f32 %v830, %v574
        %v847 = vmul.f32 %v831, %v575
        %v848 = vmul.f32 %v832, %v576
        %v849 = vmul.f32 %v833, 1.442695
        %v850 = vpow.pop %v849
        %v851 = vmul.f32 %v834, 1.442695
        %v852 = vpow.pop %v851
        %v853 = vmul.f32 %v835, 1.442695
        %v854 = vpow.pop %v853
        %v855 = vmul.f32 %v836, 1.442695
        %v856 = vpow.pop %v855
        %v857 = vmul.f32 %v837, 1.442695
        %v858 = vpow.pop %v857
        %v859 = vmul.f32 %v838, 1.442695
        %v860 = vpow.pop %v859
        %v861 = vmul.f32 %v839, 1.442695
        %v862 = vpow.pop %v861
        %v863 = vmul.f32 %v840, 1.442695
        %v864 = vpow.pop %v863
        %v865 = vmul.f32 %v841, 1.442695
        %v866 = vpow.pop %v865
        %v867 = vmul.f32 %v842, 1.442695
        %v868 = vpow.pop %v867
        %v869 = vmul.f32 %v843, 1.442695
        %v870 = vpow.pop %v869
        %v871 = vmul.f32 %v844, 1.442695
        %v872 = vpow.pop %v871
        %v873 = vmul.f32 %v845, 1.442695
        %v874 = vpow.pop %v873
        %v875 = vmul.f32 %v846, 1.442695
        %v876 = vpow.pop %v875
        %v877 = vmul.f32 %v847, 1.442695
        %v878 = vpow.pop %v877
        %v879 = vmul.f32 %v848, 1.442695
        %v880 = vpow.pop %v879
        %v881 = vmul.f32 %v801, %v850
        %v882 = vmul.f32 %v802, %v852
        %v883 = vmul.f32 %v803, %v854
        %v884 = vmul.f32 %v804, %v856
        %v885 = vmul.f32 %v805, %v858
        %v886 = vmul.f32 %v806, %v860
        %v887 = vmul.f32 %v807, %v862
        %v888 = vmul.f32 %v808, %v864
        %v889 = vmul.f32 %v809, %v866
        %v890 = vmul.f32 %v810, %v868
        %v891 = vmul.f32 %v811, %v870
        %v892 = vmul.f32 %v812, %v872
        %v893 = vmul.f32 %v813, %v874
        %v894 = vmul.f32 %v814, %v876
        %v895 = vmul.f32 %v815, %v878
        %v896 = vmul.f32 %v816, %v880
        %v897 = vsub.f32 %v769, %v881
        %v898 = vsub.f32 %v770, %v882
        %v899 = vsub.f32 %v771, %v883
        %v900 = vsub.f32 %v772, %v884
        %v901 = vsub.f32 %v773, %v885
        %v902 = vsub.f32 %v774, %v886
        %v903 = vsub.f32 %v775, %v887
        %v904 = vsub.f32 %v776, %v888
        %v905 = vsub.f32 %v777, %v889
        %v906 = vsub.f32 %v778, %v890
        %v907 = vsub.f32 %v779, %v891
        %v908 = vsub.f32 %v780, %v892
        %v909 = vsub.f32 %v781, %v893
        %v910 = vsub.f32 %v782, %v894
        %v911 = vsub.f32 %v783, %v895
        %v912 = vsub.f32 %v784, %v896
        %v913 = vmul.f32 %v467, %v897
        %v914 = vmul.f32 %v471, %v898
        %v915 = vmul.f32 %v477, %v899
        %v916 = vmul.f32 %v481, %v900
        %v917 = vmul.f32 %v487, %v901
        %v918 = vmul.f32 %v491, %v902
        %v919 = vmul.f32 %v497, %v903
        %v920 = vmul.f32 %v501, %v904
        %v921 = vmul.f32 %v507, %v905
        %v922 = vmul.f32 %v511, %v906
        %v923 = vmul.f32 %v517, %v907
        %v924 = vmul.f32 %v521, %v908
        %v925 = vmul.f32 %v527, %v909
        %v926 = vmul.f32 %v531, %v910
        %v927 = vmul.f32 %v537, %v911
        %v928 = vmul.f32 %v541, %v912
        %929 = vst [vmem:[%s276] sm:$0xff] %v913
        %930 = vst [vmem:[%s276 + $0x8] sm:$0xff] %v914
        %931 = vst [vmem:[%s276 + $0x10] sm:$0xff] %v915
        %932 = vst [vmem:[%s276 + $0x18] sm:$0xff] %v916
        %933 = vst [vmem:[%s276 + $0x20] sm:$0xff] %v917
        %934 = vst [vmem:[%s276 + $0x28] sm:$0xff] %v918
        %935 = vst [vmem:[%s276 + $0x30] sm:$0xff] %v919
        %936 = vst [vmem:[%s276 + $0x38] sm:$0xff] %v920
        %937 = vst [vmem:[%s276 + $0x40] sm:$0xff] %v921
        %938 = vst [vmem:[%s276 + $0x48] sm:$0xff] %v922
        %939 = vst [vmem:[%s276 + $0x50] sm:$0xff] %v923
        %940 = vst [vmem:[%s276 + $0x58] sm:$0xff] %v924
        %941 = vst [vmem:[%s276 + $0x60] sm:$0xff] %v925
        %942 = vst [vmem:[%s276 + $0x68] sm:$0xff] %v926
        %943 = vst [vmem:[%s276 + $0x70] sm:$0xff] %v927
        %944 = vst [vmem:[%s276 + $0x78] sm:$0xff] %v928
        %s945 = sand.u32 %s117, 1
        %s946 = scalar_lea.sflag [#allocation4], %s945
        %s947 = sand.u32 %s117, 1
        %s948 = smul.addr %s947, 128
        %s949 = scalar_lea.vmem [#allocation3], %s948
        // Predicated region
        $region71: #{tpu_custom_call.1} parent=65 // pred_check
          %p950 = pneg %p127
        $region72: #{tpu_custom_call.1} parent=65 // pred_check_branch
          %952 = sbr.rel (%p950) target = $region74
        $region73: #{tpu_custom_call.1} parent=65 // pred_region
          %s953 = smul.u32 16, %s22
          %s955 = ssub.s32 2048, 2048
          %956 = vsyncadd %s946, %s955
          %s957 = smul.addr %s953, 2
          %s958 = sadd.s32 %s21, %s957
          %s959 = smul.addr %s958, 128
          %s960 = scalar_lea.hbm %s3, %s959
          %s961 = sshll.u32 %s949, 4
          %s962 = int_to_ptr.vmem [resolvable:$true] %s961
          %967 = dma.vmem_to_hbm [thread:$0]  %s962, 2048, %s960, %s946, 128, 256, 8
        $region74: #{tpu_custom_call.1} parent=65 // pred_fallthru
          _
      $region66: #{tpu_custom_call.1} parent=5 // pred_fallthru
        _
      %p968 = scmp.le.s32.totalorder 2, %s12
      // Predicated region
      $region75: #{tpu_custom_call.1} parent=5 // pred_check
        %p969 = pneg %p968
      $region76: #{tpu_custom_call.1} parent=5 // pred_check_branch
        %971 = sbr.rel (%p969) target = $region78
      $region77: #{tpu_custom_call.1} parent=5 // pred_region
        %s972 = ssub.s32 %s12, 2
        // Predicated region
        $region79: #{tpu_custom_call.1} parent=77 // pred_check
          %p973 = pneg %p133
        $region80: #{tpu_custom_call.1} parent=77 // pred_check_branch
          %975 = sbr.rel (%p973) target = $region82
        $region81: #{tpu_custom_call.1} parent=77 // pred_region
          %s976 = sand.u32 %s118, 1
          %s977 = scalar_lea.sflag [#allocation4], %s976
          %s978 = sand.u32 %s118, 1
          %s979 = smul.addr %s978, 128
          %s980 = scalar_lea.vmem [#allocation3], %s979
          %981 = dma.done %s977, 2048
        $region82: #{tpu_custom_call.1} parent=77 // pred_fallthru
          _
      $region78: #{tpu_custom_call.1} parent=5 // pred_fallthru
        _
    $region6: #{tpu_custom_call.1} parent=1 // loop_footer
      %s16 = sadd.s32 1, %s12
    $region7: #{tpu_custom_call.1} parent=1 // loop_footer_branch
      %11 = sbr.rel target = $region3
    $region8: #{tpu_custom_call.1} parent=1 // loop_exit
      _
    %982 = vsyncpa [#allocation4], 1
    %s983 = scalar_lea.sflag [#allocation4], 1
    %984 = vsyncpa %s983, 1

</llo_original>
